<compile_context>
chip_gen: v7x
topology: tpu7x:2x2x1
jax: 0.10.0
libtpu: 0.0.40
codegen_flags: <defaults>
</compile_context>

<pallas_src>
import jax
import jax.numpy as jnp
from jax.experimental import pallas as pl
from jax.experimental.pallas import tpu as pltpu


def _round_up(x, m):
    return (x + m - 1) // m * m


# ----------------------------------------------------------------------------- kernel
def _classifier_kernel(
    x_ref,                   # (TM, TK)       bf16  streamed input tile
    wbb_ref,                 # (TK, Fp)       bf16  streamed backbone weight tile
    bbb_ref,                 # (1, Fp)        f32   backbone bias        (resident)
    w1_ref, b1_ref,          # (Fp, Dp) bf16 / (1, Dp) f32   bottleneck (BN folded)
    wh1_ref, bh1_ref,        # (Dp, 2Wp) bf16 / (1, 2Wp) f32 fused head+adv_head L1
    wh2_ref, bh2_ref,        # (2Wp, OUTP) bf16 / (1, OUTP) f32 block-diag L2 (padded)
    out_ref,                 # (TM, OUTP)     f32   lane-dense output slab
    acc_ref,                 # (TM, Fp)       f32   backbone accumulator (scratch)
):
    k = pl.program_id(1)

    @pl.when(k == 0)
    def _init():
        # Backbone bias folded into the accumulator init: saves a full (TM, Fp)
        # f32 VPU add + its vld/vst traffic in the epilogue.
        acc_ref[...] = jnp.broadcast_to(bbb_ref[...], acc_ref.shape)

    # backbone: K-tiled streaming matmul, f32 accumulation on the MXU.
    acc_ref[...] += jnp.dot(
        x_ref[...], wbb_ref[...], preferred_element_type=jnp.float32)

    @pl.when(k == pl.num_programs(1) - 1)
    def _finish():
        cdt = w1_ref.dtype                                   # compute (stream) dtype
        feat = acc_ref[...]                                  # (TM, Fp) f32, bias included

        # bottleneck linear (BatchNorm folded in) + ReLU (f32 epilogue).
        z = jnp.dot(feat.astype(cdt), w1_ref[...],
                    preferred_element_type=jnp.float32) + b1_ref[...]
        f = jnp.maximum(z, 0.0)

        # grl_layer is identity in forward; head and adv_head fused into one
        # (Dp, 2Wp) matmul followed by one block-diagonal (2Wp, OUTP) matmul.
        h = jnp.maximum(
            jnp.dot(f.astype(cdt), wh1_ref[...],
                    preferred_element_type=jnp.float32) + bh1_ref[...], 0.0)
        out = jnp.dot(h.astype(cdt), wh2_ref[...],
                      preferred_element_type=jnp.float32) + bh2_ref[...]
        out_ref[...] = out.astype(out_ref.dtype)


# ----------------------------------------------------------------------------- param prep (one-time, OUT of the hot path)
def prepare_params(params, *, compute_dtype=jnp.bfloat16, block_k=1024):
    """Fold eval-mode BN into the bottleneck linear, fuse head/adv_head, pad all
    lane/contraction dims to multiples of 128, pre-pad the dominant backbone
    weight along K to the streaming tile size, and cast streamed weights to the
    compute dtype.  Call ONCE; the result is reused by every forward call."""
    eps = 1e-5
    f32 = jnp.float32

    K, F = params["wbb"].shape
    D = params["w1"].shape[1]
    W = params["wh1"].shape[1]
    C = params["wh2"].shape[1]

    Fp = _round_up(F, 128)
    Dp = _round_up(D, 128)
    Wp = _round_up(W, 128)
    out_pad = _round_up(max(2 * C, 128), 128)

    tk = min(block_k, _round_up(K, 128))
    kp = _round_up(K, tk)

    # BatchNorm fold (eval mode, running stats).
    scale = params["gamma"] * jax.lax.rsqrt(params["var"] + eps)          # (1, D)
    w1f = params["w1"] * scale                                            # (F, D)
    b1f = (params["b1"] - params["mean"]) * scale + params["beta"]        # (1, D)

    # Backbone weight / bias, pre-padded once.
    # TODO(synk): on v7x the backbone weight could be streamed as fp8 (e4m3)
    # to halve the dominant HBM stream if accuracy allows; kept bf16 here.
    wbb = jnp.zeros((kp, Fp), compute_dtype).at[:K, :F].set(
        params["wbb"].astype(compute_dtype))
    bbb = jnp.zeros((1, Fp), f32).at[:, :F].set(params["bbb"].astype(f32))

    # Bottleneck (padded; padded rows/cols are zero so they contribute nothing).
    w1 = jnp.zeros((Fp, Dp), f32).at[:F, :D].set(w1f)
    b1 = jnp.zeros((1, Dp), f32).at[:, :D].set(b1f)

    # Fused head + adv_head L1: head in columns [0:W], adv in [Wp:Wp+W].
    wh1 = jnp.zeros((Dp, 2 * Wp), f32)
    wh1 = wh1.at[:D, :W].set(params["wh1"])
    wh1 = wh1.at[:D, Wp:Wp + W].set(params["wa1"])
    bh1 = jnp.zeros((1, 2 * Wp), f32)
    bh1 = bh1.at[:, :W].set(params["bh1"])
    bh1 = bh1.at[:, Wp:Wp + W].set(params["ba1"])

    # Block-diagonal L2: head rows -> cols [0:C], adv rows -> cols [C:2C].
    wh2 = jnp.zeros((2 * Wp, out_pad), f32)
    wh2 = wh2.at[:W, :C].set(params["wh2"])
    wh2 = wh2.at[Wp:Wp + W, C:2 * C].set(params["wa2"])
    bh2 = jnp.zeros((1, out_pad), f32)
    bh2 = bh2.at[:, :C].set(params["bh2"])
    bh2 = bh2.at[:, C:2 * C].set(params["ba2"])

    return dict(
        wbb=wbb, bbb=bbb,
        w1=w1.astype(compute_dtype), b1=b1,
        wh1=wh1.astype(compute_dtype), bh1=bh1,
        wh2=wh2.astype(compute_dtype), bh2=bh2,
        K=K, kp=kp, tk=tk, Fp=Fp, Dp=Dp, Wp=Wp,
        out_pad=out_pad, num_classes=C,
        compute_dtype=jnp.dtype(compute_dtype),
    )


# ----------------------------------------------------------------------------- wrapper
def _vmem_limit_bytes():
    # Per-generation VMEM budget: ~96 MiB on v5e/v6e (128 MiB physical), ~56 MiB
    # on v7x (64 MiB physical).  Fall back to the v7x-safe value if query fails.
    try:
        cap = int(pltpu.get_tpu_info().vmem_capacity_bytes)
        return int(max(32 << 20, min(cap - (8 << 20), 96 << 20)))
    except Exception:
        return 56 << 20


def image_classifier_forward(x, prep, *, block_m=512):
    """x: (B, C, H, W).  prep: output of prepare_params (computed once, outside
    the hot path).  Returns (outputs, outputs_adv), each (B, num_classes) f32."""
    B = x.shape[0]
    x_flat = x.reshape(B, -1)                      # glue: NCHW -> (B, C*H*W)
    K = x_flat.shape[1]
    assert K == prep["K"], "input feature size does not match prepared params"

    cdt = prep["compute_dtype"]
    kp, tk = prep["kp"], prep["tk"]
    Fp, Dp, Wp = prep["Fp"], prep["Dp"], prep["Wp"]
    out_pad, C = prep["out_pad"], prep["num_classes"]

    # One M tile covering the whole padded batch where possible, so the large
    # (K, F) backbone weight is streamed from HBM exactly once.  tm is a
    # multiple of 16 (bf16 packs 16 rows per sublane group).
    tm = min(block_m, _round_up(B, 16))
    mp = _round_up(B, tm)
    num_m_tiles = mp // tm

    # Only pad / cast x when actually needed.
    x_c = x_flat.astype(cdt)
    if (mp, kp) != (B, K):
        x_p = jnp.zeros((mp, kp), cdt).at[:B, :K].set(x_c)
    else:
        x_p = x_c

    grid = (num_m_tiles, kp // tk)

    def _resident(arr):
        # Constant-index operands: single buffer (no pointless double-buffering).
        return pl.BlockSpec(arr.shape, lambda i, k: (0, 0),
                            pipeline_mode=pl.Buffered(1))

    grid_spec = pltpu.PrefetchScalarGridSpec(
        num_scalar_prefetch=0,
        grid=grid,
        in_specs=[
            pl.BlockSpec((tm, tk), lambda i, k: (i, k)),     # x tile (streamed)
            pl.BlockSpec((tk, Fp), lambda i, k: (k, 0)),     # backbone weight tile
            _resident(prep["bbb"]),
            _resident(prep["w1"]), _resident(prep["b1"]),
            _resident(prep["wh1"]), _resident(prep["bh1"]),
            _resident(prep["wh2"]), _resident(prep["bh2"]),
        ],
        out_specs=pl.BlockSpec((tm, out_pad), lambda i, k: (i, 0)),
        scratch_shapes=[pltpu.VMEM((tm, Fp), jnp.float32)],
    )

    itemsize = cdt.itemsize
    flops = 2 * mp * (kp * Fp + Fp * Dp + Dp * 2 * Wp + 2 * Wp * out_pad)
    bytes_accessed = (
        mp * kp * itemsize
        + num_m_tiles * kp * Fp * itemsize                   # wbb per M tile
        + (Fp * Dp + Dp * 2 * Wp + 2 * Wp * out_pad) * itemsize
        + 4 * (Fp + Dp + 2 * Wp + out_pad)
        + mp * out_pad * 4)
    cost = pl.CostEstimate(flops=flops, transcendentals=0,
                           bytes_accessed=bytes_accessed)

    # Megacore batch split only when each core keeps a compute-bound M tile;
    # otherwise both cores would duplicate the wbb HBM stream (v7x).
    m_sem = "parallel" if (num_m_tiles > 1 and tm >= 256) else "arbitrary"

    out_all = pl.pallas_call(
        _classifier_kernel,
        out_shape=jax.ShapeDtypeStruct((mp, out_pad), jnp.float32),
        grid_spec=grid_spec,
        compiler_params=pltpu.CompilerParams(
            dimension_semantics=(m_sem, "arbitrary"),
            vmem_limit_bytes=_vmem_limit_bytes()),
        cost_estimate=cost,
    )(x_p, prep["wbb"], prep["bbb"], prep["w1"], prep["b1"],
      prep["wh1"], prep["bh1"], prep["wh2"], prep["bh2"])

    outputs = out_all[:B, :C]
    outputs_adv = out_all[:B, C:2 * C]
    return outputs, outputs_adv


# ----------------------------------------------------------------------------- params
def init_params(key, in_features, backbone_out, bottleneck_dim, width, num_classes):
    """Deterministic parameter init mirroring the PyTorch __init__ (eval mode)."""
    ks = jax.random.split(key, 8)
    f32 = jnp.float32

    wbb = jax.random.normal(ks[0], (in_features, backbone_out), f32) * 0.01
    bbb = jnp.zeros((1, backbone_out), f32)

    w1 = jax.random.normal(ks[1], (backbone_out, bottleneck_dim), f32) * 0.005
    b1 = jnp.full((1, bottleneck_dim), 0.1, f32)

    gamma = jnp.ones((1, bottleneck_dim), f32)
    beta = jnp.zeros((1, bottleneck_dim), f32)
    mean = jnp.zeros((1, bottleneck_dim), f32)
    var = jnp.ones((1, bottleneck_dim), f32)

    wh1 = jax.random.normal(ks[2], (bottleneck_dim, width), f32) * 0.01
    bh1 = jnp.zeros((1, width), f32)
    wh2 = jax.random.normal(ks[3], (width, num_classes), f32) * 0.01
    bh2 = jnp.zeros((1, num_classes), f32)

    wa1 = jax.random.normal(ks[4], (bottleneck_dim, width), f32) * 0.01
    ba1 = jnp.zeros((1, width), f32)
    wa2 = jax.random.normal(ks[5], (width, num_classes), f32) * 0.01
    ba2 = jnp.zeros((1, num_classes), f32)

    return dict(
        wbb=wbb, bbb=bbb, w1=w1, b1=b1,
        gamma=gamma, beta=beta, mean=mean, var=var,
        wh1=wh1, bh1=bh1, wh2=wh2, bh2=bh2,
        wa1=wa1, ba1=ba1, wa2=wa2, ba2=ba2,
    )


# ----------------------------------------------------------------------------- references
def _reference_prepared(x, prep):
    """Pure-JAX reference using the SAME prepared (folded/fused/padded) params
    and precision transforms as the kernel."""
    cdt = prep["compute_dtype"]
    B = x.shape[0]
    K = prep["K"]
    xf = x.reshape(B, -1).astype(cdt)
    feat = jnp.dot(xf, prep["wbb"][:K],
                   preferred_element_type=jnp.float32) + prep["bbb"]
    z = jnp.dot(feat.astype(cdt), prep["w1"],
                preferred_element_type=jnp.float32) + prep["b1"]
    f = jnp.maximum(z, 0.0)
    h = jnp.maximum(
        jnp.dot(f.astype(cdt), prep["wh1"],
                preferred_element_type=jnp.float32) + prep["bh1"], 0.0)
    out = jnp.dot(h.astype(cdt), prep["wh2"],
                  preferred_element_type=jnp.float32) + prep["bh2"]
    C = prep["num_classes"]
    return out[:, :C], out[:, C:2 * C]


def _reference_f32(x, p):
    """Full-precision module reference (un-fused, un-folded) for a coarse check."""
    B = x.shape[0]
    xf = x.reshape(B, -1).astype(jnp.float32)
    feat = xf @ p["wbb"] + p["bbb"]
    z = feat @ p["w1"] + p["b1"]
    z = (z - p["mean"]) / jnp.sqrt(p["var"] + 1e-5) * p["gamma"] + p["beta"]
    f = jnp.maximum(z, 0.0)
    h = jnp.maximum(f @ p["wh1"] + p["bh1"], 0.0)
    out = h @ p["wh2"] + p["bh2"]
    a = jnp.maximum(f @ p["wa1"] + p["ba1"], 0.0)
    out_adv = a @ p["wa2"] + p["ba2"]
    return out, out_adv


# ----------------------------------------------------------------------------- main
if __name__ == "__main__":
    B, C, H, W = 2, 4, 16, 16
    backbone_out = 64
    bottleneck_dim = 32
    width = 32
    num_classes = 10

    key = jax.random.PRNGKey(0)
    kx, kp = jax.random.split(key)
    x = jax.random.normal(kx, (B, C, H, W), jnp.float32)
    params = init_params(kp, C * H * W, backbone_out, bottleneck_dim, width, num_classes)

    # One-time parameter preparation (folding / fusion / padding) out of the hot path.
    prep = prepare_params(params, compute_dtype=jnp.bfloat16, block_k=1024)

    outputs, outputs_adv = image_classifier_forward(x, prep)
    jax.block_until_ready((outputs, outputs_adv))

    assert outputs.shape == (B, num_classes) and outputs_adv.shape == (B, num_classes)

    # Strict check vs a pure-JAX reference using the same bf16-stream / f32-acc math.
    ref_out, ref_adv = _reference_prepared(x, prep)
    assert jnp.allclose(outputs, ref_out, atol=5e-5, rtol=1e-3)
    assert jnp.allclose(outputs_adv, ref_adv, atol=5e-5, rtol=1e-3)

    # Coarse check vs the full-f32 module semantics (bf16 streaming noise bounded).
    f32_out, f32_adv = _reference_f32(x, params)
    assert jnp.allclose(outputs, f32_out, atol=5e-3)
    assert jnp.allclose(outputs_adv, f32_adv, atol=5e-3)

    # TODO(synk): training-mode BatchNorm batch statistics, Dropout RNG, and the
    # GRL gradient-reversal (backward-only) are not modeled; eval-mode forward only.
    print("KERNEL_OK")
</pallas_src>

<mosaic_0001>
module attributes {stable_mosaic.version = 11 : i64} {
  func.func @_classifier_kernel(%arg0: i32, %arg1: i32, %arg2: memref<16x1024xbf16, #tpu.memory_space<vmem>>, %arg3: memref<1024x128xbf16, #tpu.memory_space<vmem>>, %arg4: memref<1x128xf32, #tpu.memory_space<vmem>>, %arg5: memref<128x128xbf16, #tpu.memory_space<vmem>>, %arg6: memref<1x128xf32, #tpu.memory_space<vmem>>, %arg7: memref<128x256xbf16, #tpu.memory_space<vmem>>, %arg8: memref<1x256xf32, #tpu.memory_space<vmem>>, %arg9: memref<256x128xbf16, #tpu.memory_space<vmem>>, %arg10: memref<1x128xf32, #tpu.memory_space<vmem>>, %arg11: memref<16x128xf32, #tpu.memory_space<vmem>>, %arg12: memref<16x128xf32, #tpu.memory_space<vmem>>) attributes {dimension_semantics = [#tpu.dimension_semantics<arbitrary>, #tpu.dimension_semantics<arbitrary>], iteration_bounds = array<i64: 1, 1>, scalar_prefetch = 0 : i64, scratch_operands = 1 : i64, tpu.core_type = #tpu.core_type<tc>, window_params = [{transform_indices = @transform_0, window_bounds = array<i64: 16, 1024>}, {transform_indices = @transform_1, window_bounds = array<i64: 1024, 128>}, {pipeline_mode = #tpu.pipeline_mode<synchronous>, transform_indices = @transform_2, window_bounds = array<i64: 1, 128>}, {pipeline_mode = #tpu.pipeline_mode<synchronous>, transform_indices = @transform_3, window_bounds = array<i64: 128, 128>}, {pipeline_mode = #tpu.pipeline_mode<synchronous>, transform_indices = @transform_4, window_bounds = array<i64: 1, 128>}, {pipeline_mode = #tpu.pipeline_mode<synchronous>, transform_indices = @transform_5, window_bounds = array<i64: 128, 256>}, {pipeline_mode = #tpu.pipeline_mode<synchronous>, transform_indices = @transform_6, window_bounds = array<i64: 1, 256>}, {pipeline_mode = #tpu.pipeline_mode<synchronous>, transform_indices = @transform_7, window_bounds = array<i64: 256, 128>}, {pipeline_mode = #tpu.pipeline_mode<synchronous>, transform_indices = @transform_8, window_bounds = array<i64: 1, 128>}, {transform_indices = @transform_9, window_bounds = array<i64: 16, 128>}]} {
    %c0_i32 = arith.constant 0 : i32
    %0 = arith.cmpi eq, %arg1, %c0_i32 : i32
    %1 = arith.extui %0 : i1 to i32
    %c0_i32_0 = arith.constant 0 : i32
    %2 = arith.cmpi ne, %1, %c0_i32_0 : i32
    scf.if %2 {
      %c0_10 = arith.constant 0 : index
      %c0_11 = arith.constant 0 : index
      %12 = vector.load %arg4[%c0_10, %c0_11] : memref<1x128xf32, #tpu.memory_space<vmem>>, vector<1x128xf32>
      %13 = vector.shape_cast %12 : vector<1x128xf32> to vector<1x128xf32>
      %14 = vector.broadcast %13 : vector<1x128xf32> to vector<16x128xf32>
      %c0_12 = arith.constant 0 : index
      %c0_13 = arith.constant 0 : index
      %15 = vector.load %arg12[%c0_12, %c0_13] : memref<16x128xf32, #tpu.memory_space<vmem>>, vector<16x128xf32>
      tpu.vector_store %arg12[%c0_12, %c0_13], %14 {strides = array<i32>} : memref<16x128xf32, #tpu.memory_space<vmem>>, vector<16x128xf32>,
    } else {
    }
    %c0 = arith.constant 0 : index
    %c0_1 = arith.constant 0 : index
    %3 = vector.load %arg12[%c0, %c0_1] : memref<16x128xf32, #tpu.memory_space<vmem>>, vector<16x128xf32>
    %c0_2 = arith.constant 0 : index
    %c0_3 = arith.constant 0 : index
    %4 = vector.load %arg2[%c0_2, %c0_3] : memref<16x1024xbf16, #tpu.memory_space<vmem>>, vector<16x1024xbf16>
    %c0_4 = arith.constant 0 : index
    %c0_5 = arith.constant 0 : index
    %5 = vector.load %arg3[%c0_4, %c0_5] : memref<1024x128xbf16, #tpu.memory_space<vmem>>, vector<1024x128xbf16>
    %cst = arith.constant dense<0.000000e+00> : vector<16x128xf32>
    %6 = tpu.matmul %4, %5, %cst {dimension_numbers = #tpu.dot_dimension_numbers<[1], [0], [0], [1], [0, 0, 1, 1], [], []>} : vector<16x1024xbf16>, vector<1024x128xbf16>, vector<16x128xf32> -> vector<16x128xf32>
    %7 = arith.addf %3, %6 : vector<16x128xf32>
    %c0_6 = arith.constant 0 : index
    %c0_7 = arith.constant 0 : index
    %8 = vector.load %arg12[%c0_6, %c0_7] : memref<16x128xf32, #tpu.memory_space<vmem>>, vector<16x128xf32>
    tpu.vector_store %arg12[%c0_6, %c0_7], %7 {strides = array<i32>} : memref<16x128xf32, #tpu.memory_space<vmem>>, vector<16x128xf32>,
    %c0_i32_8 = arith.constant 0 : i32
    %9 = arith.cmpi eq, %arg1, %c0_i32_8 : i32
    %10 = arith.extui %9 : i1 to i32
    %c0_i32_9 = arith.constant 0 : i32
    %11 = arith.cmpi ne, %10, %c0_i32_9 : i32
    scf.if %11 {
      %c0_10 = arith.constant 0 : index
      %c0_11 = arith.constant 0 : index
      %12 = vector.load %arg12[%c0_10, %c0_11] : memref<16x128xf32, #tpu.memory_space<vmem>>, vector<16x128xf32>
      %13 = arith.truncf %12 : vector<16x128xf32> to vector<16x128xbf16>
      %c0_12 = arith.constant 0 : index
      %c0_13 = arith.constant 0 : index
      %14 = vector.load %arg5[%c0_12, %c0_13] : memref<128x128xbf16, #tpu.memory_space<vmem>>, vector<128x128xbf16>
      %cst_14 = arith.constant dense<0.000000e+00> : vector<16x128xf32>
      %15 = tpu.matmul %13, %14, %cst_14 {dimension_numbers = #tpu.dot_dimension_numbers<[1], [0], [0], [1], [0, 0, 1, 1], [], []>} : vector<16x128xbf16>, vector<128x128xbf16>, vector<16x128xf32> -> vector<16x128xf32>
      %c0_15 = arith.constant 0 : index
      %c0_16 = arith.constant 0 : index
      %16 = vector.load %arg6[%c0_15, %c0_16] : memref<1x128xf32, #tpu.memory_space<vmem>>, vector<1x128xf32>
      %17 = vector.broadcast %16 : vector<1x128xf32> to vector<16x128xf32>
      %18 = arith.addf %15, %17 : vector<16x128xf32>
      %cst_17 = arith.constant 0.000000e+00 : f32
      %19 = vector.broadcast %cst_17 : f32 to vector<16x128xf32>
      %20 = arith.maximumf %18, %19 : vector<16x128xf32>
      %21 = arith.truncf %20 : vector<16x128xf32> to vector<16x128xbf16>
      %c0_18 = arith.constant 0 : index
      %c0_19 = arith.constant 0 : index
      %22 = vector.load %arg7[%c0_18, %c0_19] : memref<128x256xbf16, #tpu.memory_space<vmem>>, vector<128x256xbf16>
      %cst_20 = arith.constant dense<0.000000e+00> : vector<16x256xf32>
      %23 = tpu.matmul %21, %22, %cst_20 {dimension_numbers = #tpu.dot_dimension_numbers<[1], [0], [0], [1], [0, 0, 1, 1], [], []>} : vector<16x128xbf16>, vector<128x256xbf16>, vector<16x256xf32> -> vector<16x256xf32>
      %c0_21 = arith.constant 0 : index
      %c0_22 = arith.constant 0 : index
      %24 = vector.load %arg8[%c0_21, %c0_22] : memref<1x256xf32, #tpu.memory_space<vmem>>, vector<1x256xf32>
      %25 = vector.broadcast %24 : vector<1x256xf32> to vector<16x256xf32>
      %26 = arith.addf %23, %25 : vector<16x256xf32>
      %cst_23 = arith.constant 0.000000e+00 : f32
      %27 = vector.broadcast %cst_23 : f32 to vector<16x256xf32>
      %28 = arith.maximumf %26, %27 : vector<16x256xf32>
      %29 = arith.truncf %28 : vector<16x256xf32> to vector<16x256xbf16>
      %c0_24 = arith.constant 0 : index
      %c0_25 = arith.constant 0 : index
      %30 = vector.load %arg9[%c0_24, %c0_25] : memref<256x128xbf16, #tpu.memory_space<vmem>>, vector<256x128xbf16>
      %cst_26 = arith.constant dense<0.000000e+00> : vector<16x128xf32>
      %31 = tpu.matmul %29, %30, %cst_26 {dimension_numbers = #tpu.dot_dimension_numbers<[1], [0], [0], [1], [0, 0, 1, 1], [], []>} : vector<16x256xbf16>, vector<256x128xbf16>, vector<16x128xf32> -> vector<16x128xf32>
      %c0_27 = arith.constant 0 : index
      %c0_28 = arith.constant 0 : index
      %32 = vector.load %arg10[%c0_27, %c0_28] : memref<1x128xf32, #tpu.memory_space<vmem>>, vector<1x128xf32>
      %33 = vector.broadcast %32 : vector<1x128xf32> to vector<16x128xf32>
      %34 = arith.addf %31, %33 : vector<16x128xf32>
      %c0_29 = arith.constant 0 : index
      %c0_30 = arith.constant 0 : index
      %35 = vector.load %arg11[%c0_29, %c0_30] : memref<16x128xf32, #tpu.memory_space<vmem>>, vector<16x128xf32>
      tpu.vector_store %arg11[%c0_29, %c0_30], %34 {strides = array<i32>} : memref<16x128xf32, #tpu.memory_space<vmem>>, vector<16x128xf32>,
    } else {
    }
    return
  }
  func.func @transform_0(%arg0: i32, %arg1: i32) -> (i32, i32) {
    %c0_i32 = arith.constant 0 : i32
    return %arg0, %arg1 : i32, i32
  }
  func.func @transform_1(%arg0: i32, %arg1: i32) -> (i32, i32) {
    %c0_i32 = arith.constant 0 : i32
    %c0_i32_0 = arith.constant 0 : i32
    return %arg1, %c0_i32 : i32, i32
  }
  func.func @transform_2(%arg0: i32, %arg1: i32) -> (i32, i32) {
    %c0_i32 = arith.constant 0 : i32
    %c0_i32_0 = arith.constant 0 : i32
    %c0_i32_1 = arith.constant 0 : i32
    return %c0_i32, %c0_i32_0 : i32, i32
  }
  func.func @transform_3(%arg0: i32, %arg1: i32) -> (i32, i32) {
    %c0_i32 = arith.constant 0 : i32
    %c0_i32_0 = arith.constant 0 : i32
    %c0_i32_1 = arith.constant 0 : i32
    return %c0_i32, %c0_i32_0 : i32, i32
  }
  func.func @transform_4(%arg0: i32, %arg1: i32) -> (i32, i32) {
    %c0_i32 = arith.constant 0 : i32
    %c0_i32_0 = arith.constant 0 : i32
    %c0_i32_1 = arith.constant 0 : i32
    return %c0_i32, %c0_i32_0 : i32, i32
  }
  func.func @transform_5(%arg0: i32, %arg1: i32) -> (i32, i32) {
    %c0_i32 = arith.constant 0 : i32
    %c0_i32_0 = arith.constant 0 : i32
    %c0_i32_1 = arith.constant 0 : i32
    return %c0_i32, %c0_i32_0 : i32, i32
  }
  func.func @transform_6(%arg0: i32, %arg1: i32) -> (i32, i32) {
    %c0_i32 = arith.constant 0 : i32
    %c0_i32_0 = arith.constant 0 : i32
    %c0_i32_1 = arith.constant 0 : i32
    return %c0_i32, %c0_i32_0 : i32, i32
  }
  func.func @transform_7(%arg0: i32, %arg1: i32) -> (i32, i32) {
    %c0_i32 = arith.constant 0 : i32
    %c0_i32_0 = arith.constant 0 : i32
    %c0_i32_1 = arith.constant 0 : i32
    return %c0_i32, %c0_i32_0 : i32, i32
  }
  func.func @transform_8(%arg0: i32, %arg1: i32) -> (i32, i32) {
    %c0_i32 = arith.constant 0 : i32
    %c0_i32_0 = arith.constant 0 : i32
    %c0_i32_1 = arith.constant 0 : i32
    return %c0_i32, %c0_i32_0 : i32, i32
  }
  func.func @transform_9(%arg0: i32, %arg1: i32) -> (i32, i32) {
    %c0_i32 = arith.constant 0 : i32
    %c0_i32_0 = arith.constant 0 : i32
    return %arg0, %c0_i32 : i32, i32
  }
}

</mosaic_0001>

<llo_original>
// kernel: tpu_custom_call.1
$region0: #{tpu_custom_call.1}
  #allocation0 [shape = 'u32[]', space=smem, size = 0x4, offset = 0x4, fixed_abs, tag = 'smem constant byte address 0x4 - core index']
  #allocation1 [shape = 'u32[144,128]{1,0:T(1,128)}', space=vmem, size = 0x12000, scoped, tag = 'internal scratch']
  #allocation2 [shape = 'f32[16,128]{1,0:T(8,128)}', space=vmem, size = 0x2000, scoped, tag = 'scratch operand']
  %s0 = inlined_call_operand.hbm [shape: bf16[16,1024], index: 0, kind: input, shape index: {}]
  %s1 = inlined_call_operand.hbm [shape: bf16[1024,128], index: 1, kind: input, shape index: {}]
  %s2 = inlined_call_operand.vmem [shape: f32[1,128], index: 2, kind: input, shape index: {}]
  %s3 = inlined_call_operand.hbm [shape: bf16[128,128], index: 3, kind: input, shape index: {}]
  %s4 = inlined_call_operand.vmem [shape: f32[1,128], index: 4, kind: input, shape index: {}]
  %s5 = inlined_call_operand.hbm [shape: bf16[128,256], index: 5, kind: input, shape index: {}]
  %s6 = inlined_call_operand.vmem [shape: f32[1,256], index: 6, kind: input, shape index: {}]
  %s7 = inlined_call_operand.hbm [shape: bf16[256,128], index: 7, kind: input, shape index: {}]
  %s8 = inlined_call_operand.vmem [shape: f32[1,128], index: 8, kind: input, shape index: {}]
  %s9 = inlined_call_operand.hbm [shape: f32[16,128], index: 9, kind: output, shape index: {}]
  %s10 = sld [smem:[#allocation0]]
  $region74: #{tpu_custom_call.1} parent=0
    _
  %s12 = ssub.s32 1, %s10
  %s13 = scalar_select 0, %s12, %s10
  $region1: #{tpu_custom_call.1} parent=0
    #allocation3 [shape = 'u8[32768]{0}', space=vmem, size = 0x8000, scoped, tag = 'input window, operand 0, single buffered']
    #allocation4 [shape = 's32[1]{0}', space=sflag, size = 0x4, scoped, tag = 'scoped memory for tpu_custom_call.1']
    #allocation5 [shape = 's32[1]{0}', space=sflag, size = 0x4, scoped, tag = 'scoped memory for tpu_custom_call.1']
    #allocation6 [shape = 'u8[262144]{0}', space=vmem, size = 0x40000, scoped, tag = 'input window, operand 1, single buffered']
    #allocation7 [shape = 's32[1]{0}', space=sflag, size = 0x4, scoped, tag = 'scoped memory for tpu_custom_call.1']
    #allocation8 [shape = 'u8[32768]{0}', space=vmem, size = 0x8000, scoped, tag = 'input window, operand 3, single buffered']
    #allocation9 [shape = 'u8[65536]{0}', space=vmem, size = 0x10000, scoped, tag = 'input window, operand 5, single buffered']
    #allocation10 [shape = 's32[1]{0}', space=sflag, size = 0x4, scoped, tag = 'scoped memory for tpu_custom_call.1']
    #allocation11 [shape = 'u8[65536]{0}', space=vmem, size = 0x10000, scoped, tag = 'input window, operand 7, single buffered']
    #allocation12 [shape = 'u8[8192]{0}', space=vmem, size = 0x2000, scoped, tag = 'output window, operand 0, single buffered']
    %14 = vsyncpa [#allocation4], 0
    %15 = vsyncpa [#allocation7], 0
    %16 = vsyncpa [#allocation10], 0
    %17 = vsyncpa [#allocation5], 0
    // Predicated region
    $region2: #{tpu_custom_call.1} parent=1 // pred_check
      _
    $region3: #{tpu_custom_call.1} parent=1 // pred_check_branch
      %19 = sbr.rel (0) target = $region5
    $region4: #{tpu_custom_call.1} parent=1 // pred_region
      %s21 = ssub.s32 1024, 1024
      %22 = vsyncadd [#allocation4], %s21
      %s23 = sshll.u32 [#allocation3], 4
      %s24 = int_to_ptr.vmem [resolvable:$true] %s23
      %29 = dma.hbm_to_vmem [thread:$0]  %s0, 1024, %s24, [#allocation4], 512, 512, 32
    $region5: #{tpu_custom_call.1} parent=1 // pred_fallthru
      _
    // Predicated region
    $region6: #{tpu_custom_call.1} parent=1 // pred_check
      _
    $region7: #{tpu_custom_call.1} parent=1 // pred_check_branch
      %31 = sbr.rel (0) target = $region9
    $region8: #{tpu_custom_call.1} parent=1 // pred_region
      %s33 = ssub.s32 8192, 8192
      %34 = vsyncadd [#allocation7], %s33
      %s35 = sshll.u32 [#allocation6], 4
      %s36 = int_to_ptr.vmem [resolvable:$true] %s35
      %41 = dma.hbm_to_vmem [thread:$0]  %s1, 8192, %s36, [#allocation7], 64, 64, 4
    $region9: #{tpu_custom_call.1} parent=1 // pred_fallthru
      _
    // Predicated region
    $region10: #{tpu_custom_call.1} parent=1 // pred_check
      _
    $region11: #{tpu_custom_call.1} parent=1 // pred_check_branch
      %43 = sbr.rel (0) target = $region13
    $region12: #{tpu_custom_call.1} parent=1 // pred_region
      _
    $region13: #{tpu_custom_call.1} parent=1 // pred_fallthru
      _
    // Predicated region
    $region14: #{tpu_custom_call.1} parent=1 // pred_check
      _
    $region15: #{tpu_custom_call.1} parent=1 // pred_check_branch
      %45 = sbr.rel (0) target = $region17
    $region16: #{tpu_custom_call.1} parent=1 // pred_region
      %s47 = ssub.s32 1024, 1024
      %48 = vsyncadd [#allocation7], %s47
      %s49 = sshll.u32 [#allocation8], 4
      %s50 = int_to_ptr.vmem [resolvable:$true] %s49
      %55 = dma.hbm_to_vmem [thread:$0]  %s3, 1024, %s50, [#allocation7], 64, 64, 4
    $region17: #{tpu_custom_call.1} parent=1 // pred_fallthru
      _
    // Predicated region
    $region18: #{tpu_custom_call.1} parent=1 // pred_check
      _
    $region19: #{tpu_custom_call.1} parent=1 // pred_check_branch
      %57 = sbr.rel (0) target = $region21
    $region20: #{tpu_custom_call.1} parent=1 // pred_region
      _
    $region21: #{tpu_custom_call.1} parent=1 // pred_fallthru
      _
    // Predicated region
    $region22: #{tpu_custom_call.1} parent=1 // pred_check
      _
    $region23: #{tpu_custom_call.1} parent=1 // pred_check_branch
      %59 = sbr.rel (0) target = $region25
    $region24: #{tpu_custom_call.1} parent=1 // pred_region
      %s61 = ssub.s32 2048, 2048
      %62 = vsyncadd [#allocation10], %s61
      %s63 = sshll.u32 [#allocation9], 4
      %s64 = int_to_ptr.vmem [resolvable:$true] %s63
      %69 = dma.hbm_to_vmem [thread:$0]  %s5, 2048, %s64, [#allocation10], 128, 128, 8
    $region25: #{tpu_custom_call.1} parent=1 // pred_fallthru
      _
    // Predicated region
    $region26: #{tpu_custom_call.1} parent=1 // pred_check
      _
    $region27: #{tpu_custom_call.1} parent=1 // pred_check_branch
      %71 = sbr.rel (0) target = $region29
    $region28: #{tpu_custom_call.1} parent=1 // pred_region
      _
    $region29: #{tpu_custom_call.1} parent=1 // pred_fallthru
      _
    // Predicated region
    $region30: #{tpu_custom_call.1} parent=1 // pred_check
      _
    $region31: #{tpu_custom_call.1} parent=1 // pred_check_branch
      %73 = sbr.rel (0) target = $region33
    $region32: #{tpu_custom_call.1} parent=1 // pred_region
      %s75 = ssub.s32 2048, 2048
      %76 = vsyncadd [#allocation10], %s75
      %s77 = sshll.u32 [#allocation11], 4
      %s78 = int_to_ptr.vmem [resolvable:$true] %s77
      %83 = dma.hbm_to_vmem [thread:$0]  %s7, 2048, %s78, [#allocation10], 64, 64, 4
    $region33: #{tpu_custom_call.1} parent=1 // pred_fallthru
      _
    // Predicated region
    $region34: #{tpu_custom_call.1} parent=1 // pred_check
      _
    $region35: #{tpu_custom_call.1} parent=1 // pred_check_branch
      %85 = sbr.rel (0) target = $region37
    $region36: #{tpu_custom_call.1} parent=1 // pred_region
      _
    $region37: #{tpu_custom_call.1} parent=1 // pred_fallthru
      _
    // Predicated region
    $region38: #{tpu_custom_call.1} parent=1 // pred_check
      _
    $region39: #{tpu_custom_call.1} parent=1 // pred_check_branch
      %87 = sbr.rel (0) target = $region41
    $region40: #{tpu_custom_call.1} parent=1 // pred_region
      %88 = dma.done [#allocation4], 1024
    $region41: #{tpu_custom_call.1} parent=1 // pred_fallthru
      _
    // Predicated region
    $region42: #{tpu_custom_call.1} parent=1 // pred_check
      _
    $region43: #{tpu_custom_call.1} parent=1 // pred_check_branch
      %90 = sbr.rel (0) target = $region45
    $region44: #{tpu_custom_call.1} parent=1 // pred_region
      %91 = dma.done [#allocation7], 8192
    $region45: #{tpu_custom_call.1} parent=1 // pred_fallthru
      _
    // Predicated region
    $region46: #{tpu_custom_call.1} parent=1 // pred_check
      _
    $region47: #{tpu_custom_call.1} parent=1 // pred_check_branch
      %93 = sbr.rel (0) target = $region49
    $region48: #{tpu_custom_call.1} parent=1 // pred_region
      %94 = dma.done [#allocation7], 1024
    $region49: #{tpu_custom_call.1} parent=1 // pred_fallthru
      _
    // Predicated region
    $region50: #{tpu_custom_call.1} parent=1 // pred_check
      _
    $region51: #{tpu_custom_call.1} parent=1 // pred_check_branch
      %96 = sbr.rel (0) target = $region53
    $region52: #{tpu_custom_call.1} parent=1 // pred_region
      %97 = dma.done [#allocation10], 2048
    $region53: #{tpu_custom_call.1} parent=1 // pred_fallthru
      _
    // Predicated region
    $region54: #{tpu_custom_call.1} parent=1 // pred_check
      _
    $region55: #{tpu_custom_call.1} parent=1 // pred_check_branch
      %99 = sbr.rel (0) target = $region57
    $region56: #{tpu_custom_call.1} parent=1 // pred_region
      %100 = dma.done [#allocation10], 2048
    $region57: #{tpu_custom_call.1} parent=1 // pred_fallthru
      _
    %p102 = scmp.eq.s32.totalorder 0, 0
    // Predicated region
    $region58: #{tpu_custom_call.1} parent=1 // pred_check
      %p103 = pneg %p102
    $region59: #{tpu_custom_call.1} parent=1 // pred_check_branch
      %105 = sbr.rel (%p103) target = $region61
    $region60: #{tpu_custom_call.1} parent=1 // pred_region
      %v106 = vld [vmem:[%s2] sm:$0x1]
      %v108 = vlaneseq
      %v109 = vshrl.u32 %v108, 7
      %v110 = vsub.s32 0, %v109
      %v111 = vrot.slane %v106, %v110
      %113 = vst [vmem:[#allocation2] sm:$0xff] %v111
      %114 = vst [vmem:[#allocation2 + $0x8] sm:$0xff] %v111
    $region61: #{tpu_custom_call.1} parent=1 // pred_fallthru
      _
    %v115 = vld [vmem:[#allocation2] sm:$0xff]
    %v116 = vld [vmem:[#allocation2 + $0x8] sm:$0xff]
    %v117 = vld [vmem:[#allocation3] sm:$0xff]
    %v118 = vld [vmem:[#allocation3 + $0x8] sm:$0xff]
    %v119 = vld [vmem:[#allocation3 + $0x10] sm:$0xff]
    %v120 = vld [vmem:[#allocation3 + $0x18] sm:$0xff]
    %v121 = vld [vmem:[#allocation3 + $0x20] sm:$0xff]
    %v122 = vld [vmem:[#allocation3 + $0x28] sm:$0xff]
    %v123 = vld [vmem:[#allocation3 + $0x30] sm:$0xff]
    %v124 = vld [vmem:[#allocation3 + $0x38] sm:$0xff]
    %v125 = vld [vmem:[#allocation6] sm:$0xf]
    %v126 = vld [vmem:[#allocation6 + $0x4] sm:$0xf]
    %v127 = vld [vmem:[#allocation6 + $0x8] sm:$0xf]
    %v128 = vld [vmem:[#allocation6 + $0xc] sm:$0xf]
    %v129 = vld [vmem:[#allocation6 + $0x10] sm:$0xf]
    %v130 = vld [vmem:[#allocation6 + $0x14] sm:$0xf]
    %v131 = vld [vmem:[#allocation6 + $0x18] sm:$0xf]
    %v132 = vld [vmem:[#allocation6 + $0x1c] sm:$0xf]
    %v133 = vld [vmem:[#allocation6 + $0x20] sm:$0xf]
    %v134 = vld [vmem:[#allocation6 + $0x24] sm:$0xf]
    %v135 = vld [vmem:[#allocation6 + $0x28] sm:$0xf]
    %v136 = vld [vmem:[#allocation6 + $0x2c] sm:$0xf]
    %v137 = vld [vmem:[#allocation6 + $0x30] sm:$0xf]
    %v138 = vld [vmem:[#allocation6 + $0x34] sm:$0xf]
    %v139 = vld [vmem:[#allocation6 + $0x38] sm:$0xf]
    %v140 = vld [vmem:[#allocation6 + $0x3c] sm:$0xf]
    %v141 = vld [vmem:[#allocation6 + $0x40] sm:$0xf]
    %v142 = vld [vmem:[#allocation6 + $0x44] sm:$0xf]
    %v143 = vld [vmem:[#allocation6 + $0x48] sm:$0xf]
    %v144 = vld [vmem:[#allocation6 + $0x4c] sm:$0xf]
    %v145 = vld [vmem:[#allocation6 + $0x50] sm:$0xf]
    %v146 = vld [vmem:[#allocation6 + $0x54] sm:$0xf]
    %v147 = vld [vmem:[#allocation6 + $0x58] sm:$0xf]
    %v148 = vld [vmem:[#allocation6 + $0x5c] sm:$0xf]
    %v149 = vld [vmem:[#allocation6 + $0x60] sm:$0xf]
    %v150 = vld [vmem:[#allocation6 + $0x64] sm:$0xf]
    %v151 = vld [vmem:[#allocation6 + $0x68] sm:$0xf]
    %v152 = vld [vmem:[#allocation6 + $0x6c] sm:$0xf]
    %v153 = vld [vmem:[#allocation6 + $0x70] sm:$0xf]
    %v154 = vld [vmem:[#allocation6 + $0x74] sm:$0xf]
    %v155 = vld [vmem:[#allocation6 + $0x78] sm:$0xf]
    %v156 = vld [vmem:[#allocation6 + $0x7c] sm:$0xf]
    %v157 = vld [vmem:[#allocation6 + $0x80] sm:$0xf]
    %v158 = vld [vmem:[#allocation6 + $0x84] sm:$0xf]
    %v159 = vld [vmem:[#allocation6 + $0x88] sm:$0xf]
    %v160 = vld [vmem:[#allocation6 + $0x8c] sm:$0xf]
    %v161 = vld [vmem:[#allocation6 + $0x90] sm:$0xf]
    %v162 = vld [vmem:[#allocation6 + $0x94] sm:$0xf]
    %v163 = vld [vmem:[#allocation6 + $0x98] sm:$0xf]
    %v164 = vld [vmem:[#allocation6 + $0x9c] sm:$0xf]
    %v165 = vld [vmem:[#allocation6 + $0xa0] sm:$0xf]
    %v166 = vld [vmem:[#allocation6 + $0xa4] sm:$0xf]
    %v167 = vld [vmem:[#allocation6 + $0xa8] sm:$0xf]
    %v168 = vld [vmem:[#allocation6 + $0xac] sm:$0xf]
    %v169 = vld [vmem:[#allocation6 + $0xb0] sm:$0xf]
    %v170 = vld [vmem:[#allocation6 + $0xb4] sm:$0xf]
    %v171 = vld [vmem:[#allocation6 + $0xb8] sm:$0xf]
    %v172 = vld [vmem:[#allocation6 + $0xbc] sm:$0xf]
    %v173 = vld [vmem:[#allocation6 + $0xc0] sm:$0xf]
    %v174 = vld [vmem:[#allocation6 + $0xc4] sm:$0xf]
    %v175 = vld [vmem:[#allocation6 + $0xc8] sm:$0xf]
    %v176 = vld [vmem:[#allocation6 + $0xcc] sm:$0xf]
    %v177 = vld [vmem:[#allocation6 + $0xd0] sm:$0xf]
    %v178 = vld [vmem:[#allocation6 + $0xd4] sm:$0xf]
    %v179 = vld [vmem:[#allocation6 + $0xd8] sm:$0xf]
    %v180 = vld [vmem:[#allocation6 + $0xdc] sm:$0xf]
    %v181 = vld [vmem:[#allocation6 + $0xe0] sm:$0xf]
    %v182 = vld [vmem:[#allocation6 + $0xe4] sm:$0xf]
    %v183 = vld [vmem:[#allocation6 + $0xe8] sm:$0xf]
    %v184 = vld [vmem:[#allocation6 + $0xec] sm:$0xf]
    %v185 = vld [vmem:[#allocation6 + $0xf0] sm:$0xf]
    %v186 = vld [vmem:[#allocation6 + $0xf4] sm:$0xf]
    %v187 = vld [vmem:[#allocation6 + $0xf8] sm:$0xf]
    %v188 = vld [vmem:[#allocation6 + $0xfc] sm:$0xf]
    %v189 = vld [vmem:[#allocation6 + $0x100] sm:$0xf]
    %v190 = vld [vmem:[#allocation6 + $0x104] sm:$0xf]
    %v191 = vld [vmem:[#allocation6 + $0x108] sm:$0xf]
    %v192 = vld [vmem:[#allocation6 + $0x10c] sm:$0xf]
    %v193 = vld [vmem:[#allocation6 + $0x110] sm:$0xf]
    %v194 = vld [vmem:[#allocation6 + $0x114] sm:$0xf]
    %v195 = vld [vmem:[#allocation6 + $0x118] sm:$0xf]
    %v196 = vld [vmem:[#allocation6 + $0x11c] sm:$0xf]
    %v197 = vld [vmem:[#allocation6 + $0x120] sm:$0xf]
    %v198 = vld [vmem:[#allocation6 + $0x124] sm:$0xf]
    %v199 = vld [vmem:[#allocation6 + $0x128] sm:$0xf]
    %v200 = vld [vmem:[#allocation6 + $0x12c] sm:$0xf]
    %v201 = vld [vmem:[#allocation6 + $0x130] sm:$0xf]
    %v202 = vld [vmem:[#allocation6 + $0x134] sm:$0xf]
    %v203 = vld [vmem:[#allocation6 + $0x138] sm:$0xf]
    %v204 = vld [vmem:[#allocation6 + $0x13c] sm:$0xf]
    %v205 = vld [vmem:[#allocation6 + $0x140] sm:$0xf]
    %v206 = vld [vmem:[#allocation6 + $0x144] sm:$0xf]
    %v207 = vld [vmem:[#allocation6 + $0x148] sm:$0xf]
    %v208 = vld [vmem:[#allocation6 + $0x14c] sm:$0xf]
    %v209 = vld [vmem:[#allocation6 + $0x150] sm:$0xf]
    %v210 = vld [vmem:[#allocation6 + $0x154] sm:$0xf]
    %v211 = vld [vmem:[#allocation6 + $0x158] sm:$0xf]
    %v212 = vld [vmem:[#allocation6 + $0x15c] sm:$0xf]
    %v213 = vld [vmem:[#allocation6 + $0x160] sm:$0xf]
    %v214 = vld [vmem:[#allocation6 + $0x164] sm:$0xf]
    %v215 = vld [vmem:[#allocation6 + $0x168] sm:$0xf]
    %v216 = vld [vmem:[#allocation6 + $0x16c] sm:$0xf]
    %v217 = vld [vmem:[#allocation6 + $0x170] sm:$0xf]
    %v218 = vld [vmem:[#allocation6 + $0x174] sm:$0xf]
    %v219 = vld [vmem:[#allocation6 + $0x178] sm:$0xf]
    %v220 = vld [vmem:[#allocation6 + $0x17c] sm:$0xf]
    %v221 = vld [vmem:[#allocation6 + $0x180] sm:$0xf]
    %v222 = vld [vmem:[#allocation6 + $0x184] sm:$0xf]
    %v223 = vld [vmem:[#allocation6 + $0x188] sm:$0xf]
    %v224 = vld [vmem:[#allocation6 + $0x18c] sm:$0xf]
    %v225 = vld [vmem:[#allocation6 + $0x190] sm:$0xf]
    %v226 = vld [vmem:[#allocation6 + $0x194] sm:$0xf]
    %v227 = vld [vmem:[#allocation6 + $0x198] sm:$0xf]
    %v228 = vld [vmem:[#allocation6 + $0x19c] sm:$0xf]
    %v229 = vld [vmem:[#allocation6 + $0x1a0] sm:$0xf]
    %v230 = vld [vmem:[#allocation6 + $0x1a4] sm:$0xf]
    %v231 = vld [vmem:[#allocation6 + $0x1a8] sm:$0xf]
    %v232 = vld [vmem:[#allocation6 + $0x1ac] sm:$0xf]
    %v233 = vld [vmem:[#allocation6 + $0x1b0] sm:$0xf]
    %v234 = vld [vmem:[#allocation6 + $0x1b4] sm:$0xf]
    %v235 = vld [vmem:[#allocation6 + $0x1b8] sm:$0xf]
    %v236 = vld [vmem:[#allocation6 + $0x1bc] sm:$0xf]
    %v237 = vld [vmem:[#allocation6 + $0x1c0] sm:$0xf]
    %v238 = vld [vmem:[#allocation6 + $0x1c4] sm:$0xf]
    %v239 = vld [vmem:[#allocation6 + $0x1c8] sm:$0xf]
    %v240 = vld [vmem:[#allocation6 + $0x1cc] sm:$0xf]
    %v241 = vld [vmem:[#allocation6 + $0x1d0] sm:$0xf]
    %v242 = vld [vmem:[#allocation6 + $0x1d4] sm:$0xf]
    %v243 = vld [vmem:[#allocation6 + $0x1d8] sm:$0xf]
    %v244 = vld [vmem:[#allocation6 + $0x1dc] sm:$0xf]
    %v245 = vld [vmem:[#allocation6 + $0x1e0] sm:$0xf]
    %v246 = vld [vmem:[#allocation6 + $0x1e4] sm:$0xf]
    %v247 = vld [vmem:[#allocation6 + $0x1e8] sm:$0xf]
    %v248 = vld [vmem:[#allocation6 + $0x1ec] sm:$0xf]
    %v249 = vld [vmem:[#allocation6 + $0x1f0] sm:$0xf]
    %v250 = vld [vmem:[#allocation6 + $0x1f4] sm:$0xf]
    %v251 = vld [vmem:[#allocation6 + $0x1f8] sm:$0xf]
    %v252 = vld [vmem:[#allocation6 + $0x1fc] sm:$0xf]
    %v261 = vunpack.c.l.b16 %v117
    %v262 = vunpack.c.h.b16 %v117
    %v263 = vunpack.c.l.b16 %v118
    %v264 = vunpack.c.h.b16 %v118
    %v265 = vunpack.c.l.b16 %v119
    %v266 = vunpack.c.h.b16 %v119
    %v267 = vunpack.c.l.b16 %v120
    %v268 = vunpack.c.h.b16 %v120
    %v269 = vunpack.c.l.b16 %v121
    %v270 = vunpack.c.h.b16 %v121
    %v271 = vunpack.c.l.b16 %v122
    %v272 = vunpack.c.h.b16 %v122
    %v273 = vunpack.c.l.b16 %v123
    %v274 = vunpack.c.h.b16 %v123
    %v275 = vunpack.c.l.b16 %v124
    %v276 = vunpack.c.h.b16 %v124
    %v277 = vpack.c.b16 %v269, %v261
    %v278 = vpack.c.b16 %v270, %v262
    %v279 = vpack.c.b16 %v271, %v263
    %v280 = vpack.c.b16 %v272, %v264
    %v281 = vpack.c.b16 %v273, %v265
    %v282 = vpack.c.b16 %v274, %v266
    %v283 = vpack.c.b16 %v275, %v267
    %v284 = vpack.c.b16 %v276, %v268
    %v421 = vunpack.c.l.b16 %v125
    %v422 = vunpack.c.l.b16 %v126
    %v423 = vunpack.c.l.b16 %v127
    %v424 = vunpack.c.l.b16 %v128
    %v425 = vunpack.c.l.b16 %v129
    %v426 = vunpack.c.l.b16 %v130
    %v427 = vunpack.c.l.b16 %v131
    %v428 = vunpack.c.l.b16 %v132
    %v429 = vunpack.c.l.b16 %v133
    %v430 = vunpack.c.l.b16 %v134
    %v431 = vunpack.c.l.b16 %v135
    %v432 = vunpack.c.l.b16 %v136
    %v433 = vunpack.c.l.b16 %v137
    %v434 = vunpack.c.l.b16 %v138
    %v435 = vunpack.c.l.b16 %v139
    %v436 = vunpack.c.l.b16 %v140
    %v437 = vunpack.c.l.b16 %v141
    %v438 = vunpack.c.l.b16 %v142
    %v439 = vunpack.c.l.b16 %v143
    %v440 = vunpack.c.l.b16 %v144
    %v441 = vunpack.c.l.b16 %v145
    %v442 = vunpack.c.l.b16 %v146
    %v443 = vunpack.c.l.b16 %v147
    %v444 = vunpack.c.l.b16 %v148
    %v445 = vunpack.c.l.b16 %v149
    %v446 = vunpack.c.l.b16 %v150
    %v447 = vunpack.c.l.b16 %v151
    %v448 = vunpack.c.l.b16 %v152
    %v449 = vunpack.c.l.b16 %v153
    %v450 = vunpack.c.l.b16 %v154
    %v451 = vunpack.c.l.b16 %v155
    %v452 = vunpack.c.l.b16 %v156
    %v453 = vunpack.c.l.b16 %v157
    %v454 = vunpack.c.l.b16 %v158
    %v455 = vunpack.c.l.b16 %v159
    %v456 = vunpack.c.l.b16 %v160
    %v457 = vunpack.c.l.b16 %v161
    %v458 = vunpack.c.l.b16 %v162
    %v459 = vunpack.c.l.b16 %v163
    %v460 = vunpack.c.l.b16 %v164
    %v461 = vunpack.c.l.b16 %v165
    %v462 = vunpack.c.l.b16 %v166
    %v463 = vunpack.c.l.b16 %v167
    %v464 = vunpack.c.l.b16 %v168
    %v465 = vunpack.c.l.b16 %v169
    %v466 = vunpack.c.l.b16 %v170
    %v467 = vunpack.c.l.b16 %v171
    %v468 = vunpack.c.l.b16 %v172
    %v469 = vunpack.c.l.b16 %v173
    %v470 = vunpack.c.l.b16 %v174
    %v471 = vunpack.c.l.b16 %v175
    %v472 = vunpack.c.l.b16 %v176
    %v473 = vunpack.c.l.b16 %v177
    %v474 = vunpack.c.l.b16 %v178
    %v475 = vunpack.c.l.b16 %v179
    %v476 = vunpack.c.l.b16 %v180
    %v477 = vunpack.c.l.b16 %v181
    %v478 = vunpack.c.l.b16 %v182
    %v479 = vunpack.c.l.b16 %v183
    %v480 = vunpack.c.l.b16 %v184
    %v481 = vunpack.c.l.b16 %v185
    %v482 = vunpack.c.l.b16 %v186
    %v483 = vunpack.c.l.b16 %v187
    %v484 = vunpack.c.l.b16 %v188
    %v485 = vunpack.c.l.b16 %v189
    %v486 = vunpack.c.l.b16 %v190
    %v487 = vunpack.c.l.b16 %v191
    %v488 = vunpack.c.l.b16 %v192
    %v489 = vunpack.c.l.b16 %v193
    %v490 = vunpack.c.l.b16 %v194
    %v491 = vunpack.c.l.b16 %v195
    %v492 = vunpack.c.l.b16 %v196
    %v493 = vunpack.c.l.b16 %v197
    %v494 = vunpack.c.l.b16 %v198
    %v495 = vunpack.c.l.b16 %v199
    %v496 = vunpack.c.l.b16 %v200
    %v497 = vunpack.c.l.b16 %v201
    %v498 = vunpack.c.l.b16 %v202
    %v499 = vunpack.c.l.b16 %v203
    %v500 = vunpack.c.l.b16 %v204
    %v501 = vunpack.c.l.b16 %v205
    %v502 = vunpack.c.l.b16 %v206
    %v503 = vunpack.c.l.b16 %v207
    %v504 = vunpack.c.l.b16 %v208
    %v505 = vunpack.c.l.b16 %v209
    %v506 = vunpack.c.l.b16 %v210
    %v507 = vunpack.c.l.b16 %v211
    %v508 = vunpack.c.l.b16 %v212
    %v509 = vunpack.c.l.b16 %v213
    %v510 = vunpack.c.l.b16 %v214
    %v511 = vunpack.c.l.b16 %v215
    %v512 = vunpack.c.l.b16 %v216
    %v513 = vunpack.c.l.b16 %v217
    %v514 = vunpack.c.l.b16 %v218
    %v515 = vunpack.c.l.b16 %v219
    %v516 = vunpack.c.l.b16 %v220
    %v517 = vunpack.c.l.b16 %v221
    %v518 = vunpack.c.l.b16 %v222
    %v519 = vunpack.c.l.b16 %v223
    %v520 = vunpack.c.l.b16 %v224
    %v521 = vunpack.c.l.b16 %v225
    %v522 = vunpack.c.l.b16 %v226
    %v523 = vunpack.c.l.b16 %v227
    %v524 = vunpack.c.l.b16 %v228
    %v525 = vunpack.c.l.b16 %v229
    %v526 = vunpack.c.l.b16 %v230
    %v527 = vunpack.c.l.b16 %v231
    %v528 = vunpack.c.l.b16 %v232
    %v529 = vunpack.c.l.b16 %v233
    %v530 = vunpack.c.l.b16 %v234
    %v531 = vunpack.c.l.b16 %v235
    %v532 = vunpack.c.l.b16 %v236
    %v533 = vunpack.c.l.b16 %v237
    %v534 = vunpack.c.l.b16 %v238
    %v535 = vunpack.c.l.b16 %v239
    %v536 = vunpack.c.l.b16 %v240
    %v537 = vunpack.c.l.b16 %v241
    %v538 = vunpack.c.l.b16 %v242
    %v539 = vunpack.c.l.b16 %v243
    %v540 = vunpack.c.l.b16 %v244
    %v541 = vunpack.c.l.b16 %v245
    %v542 = vunpack.c.l.b16 %v246
    %v543 = vunpack.c.l.b16 %v247
    %v544 = vunpack.c.l.b16 %v248
    %v545 = vunpack.c.l.b16 %v249
    %v546 = vunpack.c.l.b16 %v250
    %v547 = vunpack.c.l.b16 %v251
    %v548 = vunpack.c.l.b16 %v252
    %v549 = vpack.c.b16 %v422, %v421
    %v550 = vpack.c.b16 %v424, %v423
    %v551 = vpack.c.b16 %v426, %v425
    %v552 = vpack.c.b16 %v428, %v427
    %v553 = vpack.c.b16 %v430, %v429
    %v554 = vpack.c.b16 %v432, %v431
    %v555 = vpack.c.b16 %v434, %v433
    %v556 = vpack.c.b16 %v436, %v435
    %v557 = vpack.c.b16 %v438, %v437
    %v558 = vpack.c.b16 %v440, %v439
    %v559 = vpack.c.b16 %v442, %v441
    %v560 = vpack.c.b16 %v444, %v443
    %v561 = vpack.c.b16 %v446, %v445
    %v562 = vpack.c.b16 %v448, %v447
    %v563 = vpack.c.b16 %v450, %v449
    %v564 = vpack.c.b16 %v452, %v451
    %v565 = vpack.c.b16 %v454, %v453
    %v566 = vpack.c.b16 %v456, %v455
    %v567 = vpack.c.b16 %v458, %v457
    %v568 = vpack.c.b16 %v460, %v459
    %v569 = vpack.c.b16 %v462, %v461
    %v570 = vpack.c.b16 %v464, %v463
    %v571 = vpack.c.b16 %v466, %v465
    %v572 = vpack.c.b16 %v468, %v467
    %v573 = vpack.c.b16 %v470, %v469
    %v574 = vpack.c.b16 %v472, %v471
    %v575 = vpack.c.b16 %v474, %v473
    %v576 = vpack.c.b16 %v476, %v475
    %v577 = vpack.c.b16 %v478, %v477
    %v578 = vpack.c.b16 %v480, %v479
    %v579 = vpack.c.b16 %v482, %v481
    %v580 = vpack.c.b16 %v484, %v483
    %v581 = vpack.c.b16 %v486, %v485
    %v582 = vpack.c.b16 %v488, %v487
    %v583 = vpack.c.b16 %v490, %v489
    %v584 = vpack.c.b16 %v492, %v491
    %v585 = vpack.c.b16 %v494, %v493
    %v586 = vpack.c.b16 %v496, %v495
    %v587 = vpack.c.b16 %v498, %v497
    %v588 = vpack.c.b16 %v500, %v499
    %v589 = vpack.c.b16 %v502, %v501
    %v590 = vpack.c.b16 %v504, %v503
    %v591 = vpack.c.b16 %v506, %v505
    %v592 = vpack.c.b16 %v508, %v507
    %v593 = vpack.c.b16 %v510, %v509
    %v594 = vpack.c.b16 %v512, %v511
    %v595 = vpack.c.b16 %v514, %v513
    %v596 = vpack.c.b16 %v516, %v515
    %v597 = vpack.c.b16 %v518, %v517
    %v598 = vpack.c.b16 %v520, %v519
    %v599 = vpack.c.b16 %v522, %v521
    %v600 = vpack.c.b16 %v524, %v523
    %v601 = vpack.c.b16 %v526, %v525
    %v602 = vpack.c.b16 %v528, %v527
    %v603 = vpack.c.b16 %v530, %v529
    %v604 = vpack.c.b16 %v532, %v531
    %v605 = vpack.c.b16 %v534, %v533
    %v606 = vpack.c.b16 %v536, %v535
    %v607 = vpack.c.b16 %v538, %v537
    %v608 = vpack.c.b16 %v540, %v539
    %v609 = vpack.c.b16 %v542, %v541
    %v610 = vpack.c.b16 %v544, %v543
    %v611 = vpack.c.b16 %v546, %v545
    %v612 = vpack.c.b16 %v548, %v547
    %677 = vmatprep.subr.bf16.mxu0 0
    %678 = vmatpush1.bf16.msra.mxu0 %v549
    %679 = vmatprep.subr.bf16.mxu0 0
    %680 = vmatpush1.bf16.msra.mxu0 %v550
    %681 = vmatprep.subr.bf16.mxu0 0
    %682 = vmatpush1.bf16.msra.mxu0 %v551
    %683 = vmatprep.subr.bf16.mxu0 0
    %684 = vmatpush1.bf16.msra.mxu0 %v552
    %685 = vmatprep.subr.bf16.mxu0 0
    %686 = vmatpush1.bf16.msra.mxu0 %v553
    %687 = vmatprep.subr.bf16.mxu0 0
    %688 = vmatpush1.bf16.msra.mxu0 %v554
    %689 = vmatprep.subr.bf16.mxu0 0
    %690 = vmatpush1.bf16.msra.mxu0 %v555
    %691 = vmatprep.subr.bf16.mxu0 0
    %692 = vmatpush1.bf16.msra.mxu0 %v556
    %693 = vmatprep.subr.bf16.mxu0 0
    %694 = vmatpush1.bf16.msra.mxu0 %v557
    %695 = vmatprep.subr.bf16.mxu0 0
    %696 = vmatpush1.bf16.msra.mxu0 %v558
    %697 = vmatprep.subr.bf16.mxu0 0
    %698 = vmatpush1.bf16.msra.mxu0 %v559
    %699 = vmatprep.subr.bf16.mxu0 0
    %700 = vmatpush1.bf16.msra.mxu0 %v560
    %701 = vmatprep.subr.bf16.mxu0 0
    %702 = vmatpush1.bf16.msra.mxu0 %v561
    %703 = vmatprep.subr.bf16.mxu0 0
    %704 = vmatpush1.bf16.msra.mxu0 %v562
    %705 = vmatprep.subr.bf16.mxu0 0
    %706 = vmatpush1.bf16.msra.mxu0 %v563
    %707 = vmatprep.subr.bf16.mxu0 0
    %708 = vmatpush1.bf16.msra.mxu0 %v564
    %709 = vmatprep.mubr.bf16.mxu0 %v278
    %710 = vmatmul.mubr.bf16.gmra.mrb[0].mxu0 %v277
    %v711 = vpop.f32.mrb[0].mxu0
    %v712 = vadd.f32 0.0, %v711
    %v713 = vpop.f32.mrb[0].mxu0
    %v714 = vpop.f32.mrb[0].mxu0
    %v715 = vadd.f32 0.0, %v714
    %v716 = vpop.f32.mrb[0].mxu0
    %717 = vdwg.mxu0
    %718 = vmatprep.subr.bf16.mxu0 0
    %719 = vmatpush1.bf16.msra.mxu0 %v565
    %720 = vmatprep.subr.bf16.mxu0 0
    %721 = vmatpush1.bf16.msra.mxu0 %v566
    %722 = vmatprep.subr.bf16.mxu0 0
    %723 = vmatpush1.bf16.msra.mxu0 %v567
    %724 = vmatprep.subr.bf16.mxu0 0
    %725 = vmatpush1.bf16.msra.mxu0 %v568
    %726 = vmatprep.subr.bf16.mxu0 0
    %727 = vmatpush1.bf16.msra.mxu0 %v569
    %728 = vmatprep.subr.bf16.mxu0 0
    %729 = vmatpush1.bf16.msra.mxu0 %v570
    %730 = vmatprep.subr.bf16.mxu0 0
    %731 = vmatpush1.bf16.msra.mxu0 %v571
    %732 = vmatprep.subr.bf16.mxu0 0
    %733 = vmatpush1.bf16.msra.mxu0 %v572
    %734 = vmatprep.subr.bf16.mxu0 0
    %735 = vmatpush1.bf16.msra.mxu0 %v573
    %736 = vmatprep.subr.bf16.mxu0 0
    %737 = vmatpush1.bf16.msra.mxu0 %v574
    %738 = vmatprep.subr.bf16.mxu0 0
    %739 = vmatpush1.bf16.msra.mxu0 %v575
    %740 = vmatprep.subr.bf16.mxu0 0
    %741 = vmatpush1.bf16.msra.mxu0 %v576
    %742 = vmatprep.subr.bf16.mxu0 0
    %743 = vmatpush1.bf16.msra.mxu0 %v577
    %744 = vmatprep.subr.bf16.mxu0 0
    %745 = vmatpush1.bf16.msra.mxu0 %v578
    %746 = vmatprep.subr.bf16.mxu0 0
    %747 = vmatpush1.bf16.msra.mxu0 %v579
    %748 = vmatprep.subr.bf16.mxu0 0
    %749 = vmatpush1.bf16.msra.mxu0 %v580
    %750 = vmatprep.mubr.bf16.mxu0 %v280
    %751 = vmatmul.mubr.bf16.gmra.mrb[0].mxu0 %v279
    %v752 = vpop.f32.mrb[0].mxu0
    %v753 = vadd.f32 %v712, %v752
    %v754 = vpop.f32.mrb[0].mxu0
    %v755 = vpop.f32.mrb[0].mxu0
    %v756 = vadd.f32 %v715, %v755
    %v757 = vpop.f32.mrb[0].mxu0
    %758 = vdwg.mxu0
    %759 = vmatprep.subr.bf16.mxu0 0
    %760 = vmatpush1.bf16.msra.mxu0 %v581
    %761 = vmatprep.subr.bf16.mxu0 0
    %762 = vmatpush1.bf16.msra.mxu0 %v582
    %763 = vmatprep.subr.bf16.mxu0 0
    %764 = vmatpush1.bf16.msra.mxu0 %v583
    %765 = vmatprep.subr.bf16.mxu0 0
    %766 = vmatpush1.bf16.msra.mxu0 %v584
    %767 = vmatprep.subr.bf16.mxu0 0
    %768 = vmatpush1.bf16.msra.mxu0 %v585
    %769 = vmatprep.subr.bf16.mxu0 0
    %770 = vmatpush1.bf16.msra.mxu0 %v586
    %771 = vmatprep.subr.bf16.mxu0 0
    %772 = vmatpush1.bf16.msra.mxu0 %v587
    %773 = vmatprep.subr.bf16.mxu0 0
    %774 = vmatpush1.bf16.msra.mxu0 %v588
    %775 = vmatprep.subr.bf16.mxu0 0
    %776 = vmatpush1.bf16.msra.mxu0 %v589
    %777 = vmatprep.subr.bf16.mxu0 0
    %778 = vmatpush1.bf16.msra.mxu0 %v590
    %779 = vmatprep.subr.bf16.mxu0 0
    %780 = vmatpush1.bf16.msra.mxu0 %v591
    %781 = vmatprep.subr.bf16.mxu0 0
    %782 = vmatpush1.bf16.msra.mxu0 %v592
    %783 = vmatprep.subr.bf16.mxu0 0
    %784 = vmatpush1.bf16.msra.mxu0 %v593
    %785 = vmatprep.subr.bf16.mxu0 0
    %786 = vmatpush1.bf16.msra.mxu0 %v594
    %787 = vmatprep.subr.bf16.mxu0 0
    %788 = vmatpush1.bf16.msra.mxu0 %v595
    %789 = vmatprep.subr.bf16.mxu0 0
    %790 = vmatpush1.bf16.msra.mxu0 %v596
    %791 = vmatprep.mubr.bf16.mxu0 %v282
    %792 = vmatmul.mubr.bf16.gmra.mrb[0].mxu0 %v281
    %v793 = vpop.f32.mrb[0].mxu0
    %v794 = vadd.f32 %v753, %v793
    %v795 = vpop.f32.mrb[0].mxu0
    %v796 = vpop.f32.mrb[0].mxu0
    %v797 = vadd.f32 %v756, %v796
    %v798 = vpop.f32.mrb[0].mxu0
    %799 = vdwg.mxu0
    %800 = vmatprep.subr.bf16.mxu0 0
    %801 = vmatpush1.bf16.msra.mxu0 %v597
    %802 = vmatprep.subr.bf16.mxu0 0
    %803 = vmatpush1.bf16.msra.mxu0 %v598
    %804 = vmatprep.subr.bf16.mxu0 0
    %805 = vmatpush1.bf16.msra.mxu0 %v599
    %806 = vmatprep.subr.bf16.mxu0 0
    %807 = vmatpush1.bf16.msra.mxu0 %v600
    %808 = vmatprep.subr.bf16.mxu0 0
    %809 = vmatpush1.bf16.msra.mxu0 %v601
    %810 = vmatprep.subr.bf16.mxu0 0
    %811 = vmatpush1.bf16.msra.mxu0 %v602
    %812 = vmatprep.subr.bf16.mxu0 0
    %813 = vmatpush1.bf16.msra.mxu0 %v603
    %814 = vmatprep.subr.bf16.mxu0 0
    %815 = vmatpush1.bf16.msra.mxu0 %v604
    %816 = vmatprep.subr.bf16.mxu0 0
    %817 = vmatpush1.bf16.msra.mxu0 %v605
    %818 = vmatprep.subr.bf16.mxu0 0
    %819 = vmatpush1.bf16.msra.mxu0 %v606
    %820 = vmatprep.subr.bf16.mxu0 0
    %821 = vmatpush1.bf16.msra.mxu0 %v607
    %822 = vmatprep.subr.bf16.mxu0 0
    %823 = vmatpush1.bf16.msra.mxu0 %v608
    %824 = vmatprep.subr.bf16.mxu0 0
    %825 = vmatpush1.bf16.msra.mxu0 %v609
    %826 = vmatprep.subr.bf16.mxu0 0
    %827 = vmatpush1.bf16.msra.mxu0 %v610
    %828 = vmatprep.subr.bf16.mxu0 0
    %829 = vmatpush1.bf16.msra.mxu0 %v611
    %830 = vmatprep.subr.bf16.mxu0 0
    %831 = vmatpush1.bf16.msra.mxu0 %v612
    %832 = vmatprep.mubr.bf16.mxu0 %v284
    %833 = vmatmul.mubr.bf16.gmra.mrb[0].mxu0 %v283
    %v834 = vpop.f32.mrb[0].mxu0
    %v835 = vadd.f32 %v794, %v834
    %v836 = vpop.f32.mrb[0].mxu0
    %v837 = vpop.f32.mrb[0].mxu0
    %v838 = vadd.f32 %v797, %v837
    %v839 = vpop.f32.mrb[0].mxu0
    %840 = vdwg.mxu0
    %v841 = vadd.f32 %v115, %v835
    %v842 = vadd.f32 %v116, %v838
    %843 = vst [vmem:[#allocation2] sm:$0xff] %v841
    %844 = vst [vmem:[#allocation2 + $0x8] sm:$0xff] %v842
    // Predicated region
    $region62: #{tpu_custom_call.1} parent=1 // pred_check
      %p845 = pneg %p102
    $region63: #{tpu_custom_call.1} parent=1 // pred_check_branch
      %847 = sbr.rel (%p845) target = $region65
    $region64: #{tpu_custom_call.1} parent=1 // pred_region
      %v848 = vld [vmem:[#allocation2] sm:$0xff]
      %v849 = vld [vmem:[#allocation2 + $0x8] sm:$0xff]
      %v850 = vpack.c.bf16 %v849, %v848
      %v851 = vld [vmem:[#allocation8] sm:$0xf]
      %v852 = vld [vmem:[#allocation8 + $0x4] sm:$0xf]
      %v853 = vld [vmem:[#allocation8 + $0x8] sm:$0xf]
      %v854 = vld [vmem:[#allocation8 + $0xc] sm:$0xf]
      %v855 = vld [vmem:[#allocation8 + $0x10] sm:$0xf]
      %v856 = vld [vmem:[#allocation8 + $0x14] sm:$0xf]
      %v857 = vld [vmem:[#allocation8 + $0x18] sm:$0xf]
      %v858 = vld [vmem:[#allocation8 + $0x1c] sm:$0xf]
      %v859 = vld [vmem:[#allocation8 + $0x20] sm:$0xf]
      %v860 = vld [vmem:[#allocation8 + $0x24] sm:$0xf]
      %v861 = vld [vmem:[#allocation8 + $0x28] sm:$0xf]
      %v862 = vld [vmem:[#allocation8 + $0x2c] sm:$0xf]
      %v863 = vld [vmem:[#allocation8 + $0x30] sm:$0xf]
      %v864 = vld [vmem:[#allocation8 + $0x34] sm:$0xf]
      %v865 = vld [vmem:[#allocation8 + $0x38] sm:$0xf]
      %v866 = vld [vmem:[#allocation8 + $0x3c] sm:$0xf]
      %v867 = vld [vmem:[%s4] sm:$0x1]
      %v869 = vlaneseq
      %v870 = vshrl.u32 %v869, 7
      %v871 = vsub.s32 0, %v870
      %v872 = vrot.slane %v867, %v871
      %v890 = vunpack.c.l.b16 %v851
      %v891 = vunpack.c.l.b16 %v852
      %v892 = vunpack.c.l.b16 %v853
      %v893 = vunpack.c.l.b16 %v854
      %v894 = vunpack.c.l.b16 %v855
      %v895 = vunpack.c.l.b16 %v856
      %v896 = vunpack.c.l.b16 %v857
      %v897 = vunpack.c.l.b16 %v858
      %v898 = vunpack.c.l.b16 %v859
      %v899 = vunpack.c.l.b16 %v860
      %v900 = vunpack.c.l.b16 %v861
      %v901 = vunpack.c.l.b16 %v862
      %v902 = vunpack.c.l.b16 %v863
      %v903 = vunpack.c.l.b16 %v864
      %v904 = vunpack.c.l.b16 %v865
      %v905 = vunpack.c.l.b16 %v866
      %v906 = vpack.c.b16 %v891, %v890
      %v907 = vpack.c.b16 %v893, %v892
      %v908 = vpack.c.b16 %v895, %v894
      %v909 = vpack.c.b16 %v897, %v896
      %v910 = vpack.c.b16 %v899, %v898
      %v911 = vpack.c.b16 %v901, %v900
      %v912 = vpack.c.b16 %v903, %v902
      %v913 = vpack.c.b16 %v905, %v904
      %922 = vmatprep.subr.bf16.mxu0 0
      %923 = vmatpush1.bf16.msra.mxu0 %v906
      %924 = vmatprep.subr.bf16.mxu0 0
      %925 = vmatpush1.bf16.msra.mxu0 %v907
      %926 = vmatprep.subr.bf16.mxu0 0
      %927 = vmatpush1.bf16.msra.mxu0 %v908
      %928 = vmatprep.subr.bf16.mxu0 0
      %929 = vmatpush1.bf16.msra.mxu0 %v909
      %930 = vmatprep.subr.bf16.mxu0 0
      %931 = vmatpush1.bf16.msra.mxu0 %v910
      %932 = vmatprep.subr.bf16.mxu0 0
      %933 = vmatpush1.bf16.msra.mxu0 %v911
      %934 = vmatprep.subr.bf16.mxu0 0
      %935 = vmatpush1.bf16.msra.mxu0 %v912
      %936 = vmatprep.subr.bf16.mxu0 0
      %937 = vmatpush1.bf16.msra.mxu0 %v913
      %938 = vmatprep.subr.bf16.mxu0 0
      %939 = vmatpush1.bf16.msra.mxu0 0
      %940 = vmatprep.subr.bf16.mxu0 0
      %941 = vmatpush1.bf16.msra.mxu0 0
      %942 = vmatprep.subr.bf16.mxu0 0
      %943 = vmatpush1.bf16.msra.mxu0 0
      %944 = vmatprep.subr.bf16.mxu0 0
      %945 = vmatpush1.bf16.msra.mxu0 0
      %946 = vmatprep.subr.bf16.mxu0 0
      %947 = vmatpush1.bf16.msra.mxu0 0
      %948 = vmatprep.subr.bf16.mxu0 0
      %949 = vmatpush1.bf16.msra.mxu0 0
      %950 = vmatprep.subr.bf16.mxu0 0
      %951 = vmatpush1.bf16.msra.mxu0 0
      %952 = vmatprep.subr.bf16.mxu0 0
      %953 = vmatpush1.bf16.msra.mxu0 0
      %954 = vmatprep.mubr.bf16.mxu0 0
      %955 = vmatmul.mubr.bf16.gmra.mrb[0].mxu0 %v850
      %v956 = vpop.f32.mrb[0].mxu0
      %v957 = vadd.f32 %v872, %v956
      %v958 = vpop.f32.mrb[0].mxu0
      %v959 = vpop.f32.mrb[0].mxu0
      %v960 = vadd.f32 %v872, %v959
      %v961 = vpop.f32.mrb[0].mxu0
      %962 = vdwg.mxu0
      %v963 = vmax.f32 %v957, 0.0
      %v964 = vmax.f32 %v960, 0.0
      %v965 = vpack.c.bf16 %v964, %v963
      %v966 = vld [vmem:[#allocation9] sm:$0xff]
      %v967 = vld [vmem:[#allocation9 + $0x8] sm:$0xff]
      %v968 = vld [vmem:[#allocation9 + $0x10] sm:$0xff]
      %v969 = vld [vmem:[#allocation9 + $0x18] sm:$0xff]
      %v970 = vld [vmem:[#allocation9 + $0x20] sm:$0xff]
      %v971 = vld [vmem:[#allocation9 + $0x28] sm:$0xff]
      %v972 = vld [vmem:[#allocation9 + $0x30] sm:$0xff]
      %v973 = vld [vmem:[#allocation9 + $0x38] sm:$0xff]
      %v974 = vld [vmem:[#allocation9 + $0x40] sm:$0xff]
      %v975 = vld [vmem:[#allocation9 + $0x48] sm:$0xff]
      %v976 = vld [vmem:[#allocation9 + $0x50] sm:$0xff]
      %v977 = vld [vmem:[#allocation9 + $0x58] sm:$0xff]
      %v978 = vld [vmem:[#allocation9 + $0x60] sm:$0xff]
      %v979 = vld [vmem:[#allocation9 + $0x68] sm:$0xff]
      %v980 = vld [vmem:[#allocation9 + $0x70] sm:$0xff]
      %v981 = vld [vmem:[#allocation9 + $0x78] sm:$0xff]
      %v982 = vld [vmem:[%s6] sm:$0x3]
      %v984 = vlaneseq
      %v985 = vshrl.u32 %v984, 7
      %v986 = vsub.s32 0, %v985
      %v987 = vrot.slane %v982, %v986
      %v988 = vlaneseq
      %v989 = vshrl.u32 %v988, 7
      %v990 = vsub.s32 1, %v989
      %v991 = vrot.slane %v982, %v990
      %v1010 = vunpack.c.l.b16 %v966
      %v1011 = vunpack.c.h.b16 %v966
      %v1012 = vunpack.c.l.b16 %v967
      %v1013 = vunpack.c.h.b16 %v967
      %v1014 = vunpack.c.l.b16 %v968
      %v1015 = vunpack.c.h.b16 %v968
      %v1016 = vunpack.c.l.b16 %v969
      %v1017 = vunpack.c.h.b16 %v969
      %v1018 = vunpack.c.l.b16 %v970
      %v1019 = vunpack.c.h.b16 %v970
      %v1020 = vunpack.c.l.b16 %v971
      %v1021 = vunpack.c.h.b16 %v971
      %v1022 = vunpack.c.l.b16 %v972
      %v1023 = vunpack.c.h.b16 %v972
      %v1024 = vunpack.c.l.b16 %v973
      %v1025 = vunpack.c.h.b16 %v973
      %v1026 = vunpack.c.l.b16 %v974
      %v1027 = vunpack.c.h.b16 %v974
      %v1028 = vunpack.c.l.b16 %v975
      %v1029 = vunpack.c.h.b16 %v975
      %v1030 = vunpack.c.l.b16 %v976
      %v1031 = vunpack.c.h.b16 %v976
      %v1032 = vunpack.c.l.b16 %v977
      %v1033 = vunpack.c.h.b16 %v977
      %v1034 = vunpack.c.l.b16 %v978
      %v1035 = vunpack.c.h.b16 %v978
      %v1036 = vunpack.c.l.b16 %v979
      %v1037 = vunpack.c.h.b16 %v979
      %v1038 = vunpack.c.l.b16 %v980
      %v1039 = vunpack.c.h.b16 %v980
      %v1040 = vunpack.c.l.b16 %v981
      %v1041 = vunpack.c.h.b16 %v981
      %v1042 = vpack.c.b16 %v1012, %v1010
      %v1043 = vpack.c.b16 %v1013, %v1011
      %v1044 = vpack.c.b16 %v1016, %v1014
      %v1045 = vpack.c.b16 %v1017, %v1015
      %v1046 = vpack.c.b16 %v1020, %v1018
      %v1047 = vpack.c.b16 %v1021, %v1019
      %v1048 = vpack.c.b16 %v1024, %v1022
      %v1049 = vpack.c.b16 %v1025, %v1023
      %v1050 = vpack.c.b16 %v1028, %v1026
      %v1051 = vpack.c.b16 %v1029, %v1027
      %v1052 = vpack.c.b16 %v1032, %v1030
      %v1053 = vpack.c.b16 %v1033, %v1031
      %v1054 = vpack.c.b16 %v1036, %v1034
      %v1055 = vpack.c.b16 %v1037, %v1035
      %v1056 = vpack.c.b16 %v1040, %v1038
      %v1057 = vpack.c.b16 %v1041, %v1039
      %1074 = vmatprep.subr.bf16.mxu0 %v1043
      %1075 = vmatpush1.bf16.msra.mxu0 %v1042
      %1076 = vmatprep.subr.bf16.mxu0 %v1045
      %1077 = vmatpush1.bf16.msra.mxu0 %v1044
      %1078 = vmatprep.subr.bf16.mxu0 %v1047
      %1079 = vmatpush1.bf16.msra.mxu0 %v1046
      %1080 = vmatprep.subr.bf16.mxu0 %v1049
      %1081 = vmatpush1.bf16.msra.mxu0 %v1048
      %1082 = vmatprep.subr.bf16.mxu0 %v1051
      %1083 = vmatpush1.bf16.msra.mxu0 %v1050
      %1084 = vmatprep.subr.bf16.mxu0 %v1053
      %1085 = vmatpush1.bf16.msra.mxu0 %v1052
      %1086 = vmatprep.subr.bf16.mxu0 %v1055
      %1087 = vmatpush1.bf16.msra.mxu0 %v1054
      %1088 = vmatprep.subr.bf16.mxu0 %v1057
      %1089 = vmatpush1.bf16.msra.mxu0 %v1056
      %1090 = vmatprep.subr.bf16.mxu0 0
      %1091 = vmatpush1.bf16.msra.mxu0 0
      %1092 = vmatprep.subr.bf16.mxu0 0
      %1093 = vmatpush1.bf16.msra.mxu0 0
      %1094 = vmatprep.subr.bf16.mxu0 0
      %1095 = vmatpush1.bf16.msra.mxu0 0
      %1096 = vmatprep.subr.bf16.mxu0 0
      %1097 = vmatpush1.bf16.msra.mxu0 0
      %1098 = vmatprep.subr.bf16.mxu0 0
      %1099 = vmatpush1.bf16.msra.mxu0 0
      %1100 = vmatprep.subr.bf16.mxu0 0
      %1101 = vmatpush1.bf16.msra.mxu0 0
      %1102 = vmatprep.subr.bf16.mxu0 0
      %1103 = vmatpush1.bf16.msra.mxu0 0
      %1104 = vmatprep.subr.bf16.mxu0 0
      %1105 = vmatpush1.bf16.msra.mxu0 0
      %1106 = vmatprep.mubr.bf16.mxu0 0
      %1107 = vmatmul.mubr.bf16.gmra.mrb[0].mxu0 %v965
      %v1108 = vpop.f32.mrb[0].mxu0
      %v1109 = vadd.f32 %v987, %v1108
      %v1110 = vpop.f32.mrb[0].mxu0
      %v1111 = vadd.f32 %v991, %v1110
      %v1112 = vpop.f32.mrb[0].mxu0
      %v1113 = vadd.f32 %v987, %v1112
      %v1114 = vpop.f32.mrb[0].mxu0
      %v1115 = vadd.f32 %v991, %v1114
      %1116 = vdwg.mxu0
      %v1117 = vmax.f32 %v1109, 0.0
      %v1118 = vmax.f32 %v1111, 0.0
      %v1119 = vmax.f32 %v1113, 0.0
      %v1120 = vmax.f32 %v1115, 0.0
      %v1121 = vpack.c.bf16 %v1119, %v1117
      %v1122 = vpack.c.bf16 %v1120, %v1118
      %v1123 = vld [vmem:[#allocation11] sm:$0xf]
      %v1124 = vld [vmem:[#allocation11 + $0x4] sm:$0xf]
      %v1125 = vld [vmem:[#allocation11 + $0x8] sm:$0xf]
      %v1126 = vld [vmem:[#allocation11 + $0xc] sm:$0xf]
      %v1127 = vld [vmem:[#allocation11 + $0x10] sm:$0xf]
      %v1128 = vld [vmem:[#allocation11 + $0x14] sm:$0xf]
      %v1129 = vld [vmem:[#allocation11 + $0x18] sm:$0xf]
      %v1130 = vld [vmem:[#allocation11 + $0x1c] sm:$0xf]
      %v1131 = vld [vmem:[#allocation11 + $0x20] sm:$0xf]
      %v1132 = vld [vmem:[#allocation11 + $0x24] sm:$0xf]
      %v1133 = vld [vmem:[#allocation11 + $0x28] sm:$0xf]
      %v1134 = vld [vmem:[#allocation11 + $0x2c] sm:$0xf]
      %v1135 = vld [vmem:[#allocation11 + $0x30] sm:$0xf]
      %v1136 = vld [vmem:[#allocation11 + $0x34] sm:$0xf]
      %v1137 = vld [vmem:[#allocation11 + $0x38] sm:$0xf]
      %v1138 = vld [vmem:[#allocation11 + $0x3c] sm:$0xf]
      %v1139 = vld [vmem:[#allocation11 + $0x40] sm:$0xf]
      %v1140 = vld [vmem:[#allocation11 + $0x44] sm:$0xf]
      %v1141 = vld [vmem:[#allocation11 + $0x48] sm:$0xf]
      %v1142 = vld [vmem:[#allocation11 + $0x4c] sm:$0xf]
      %v1143 = vld [vmem:[#allocation11 + $0x50] sm:$0xf]
      %v1144 = vld [vmem:[#allocation11 + $0x54] sm:$0xf]
      %v1145 = vld [vmem:[#allocation11 + $0x58] sm:$0xf]
      %v1146 = vld [vmem:[#allocation11 + $0x5c] sm:$0xf]
      %v1147 = vld [vmem:[#allocation11 + $0x60] sm:$0xf]
      %v1148 = vld [vmem:[#allocation11 + $0x64] sm:$0xf]
      %v1149 = vld [vmem:[#allocation11 + $0x68] sm:$0xf]
      %v1150 = vld [vmem:[#allocation11 + $0x6c] sm:$0xf]
      %v1151 = vld [vmem:[#allocation11 + $0x70] sm:$0xf]
      %v1152 = vld [vmem:[#allocation11 + $0x74] sm:$0xf]
      %v1153 = vld [vmem:[#allocation11 + $0x78] sm:$0xf]
      %v1154 = vld [vmem:[#allocation11 + $0x7c] sm:$0xf]
      %v1155 = vld [vmem:[%s8] sm:$0x1]
      %v1157 = vlaneseq
      %v1158 = vshrl.u32 %v1157, 7
      %v1159 = vsub.s32 0, %v1158
      %v1160 = vrot.slane %v1155, %v1159
      %v1194 = vunpack.c.l.b16 %v1123
      %v1195 = vunpack.c.l.b16 %v1124
      %v1196 = vunpack.c.l.b16 %v1125
      %v1197 = vunpack.c.l.b16 %v1126
      %v1198 = vunpack.c.l.b16 %v1127
      %v1199 = vunpack.c.l.b16 %v1128
      %v1200 = vunpack.c.l.b16 %v1129
      %v1201 = vunpack.c.l.b16 %v1130
      %v1202 = vunpack.c.l.b16 %v1131
      %v1203 = vunpack.c.l.b16 %v1132
      %v1204 = vunpack.c.l.b16 %v1133
      %v1205 = vunpack.c.l.b16 %v1134
      %v1206 = vunpack.c.l.b16 %v1135
      %v1207 = vunpack.c.l.b16 %v1136
      %v1208 = vunpack.c.l.b16 %v1137
      %v1209 = vunpack.c.l.b16 %v1138
      %v1210 = vunpack.c.l.b16 %v1139
      %v1211 = vunpack.c.l.b16 %v1140
      %v1212 = vunpack.c.l.b16 %v1141
      %v1213 = vunpack.c.l.b16 %v1142
      %v1214 = vunpack.c.l.b16 %v1143
      %v1215 = vunpack.c.l.b16 %v1144
      %v1216 = vunpack.c.l.b16 %v1145
      %v1217 = vunpack.c.l.b16 %v1146
      %v1218 = vunpack.c.l.b16 %v1147
      %v1219 = vunpack.c.l.b16 %v1148
      %v1220 = vunpack.c.l.b16 %v1149
      %v1221 = vunpack.c.l.b16 %v1150
      %v1222 = vunpack.c.l.b16 %v1151
      %v1223 = vunpack.c.l.b16 %v1152
      %v1224 = vunpack.c.l.b16 %v1153
      %v1225 = vunpack.c.l.b16 %v1154
      %v1226 = vpack.c.b16 %v1195, %v1194
      %v1227 = vpack.c.b16 %v1197, %v1196
      %v1228 = vpack.c.b16 %v1199, %v1198
      %v1229 = vpack.c.b16 %v1201, %v1200
      %v1230 = vpack.c.b16 %v1203, %v1202
      %v1231 = vpack.c.b16 %v1205, %v1204
      %v1232 = vpack.c.b16 %v1207, %v1206
      %v1233 = vpack.c.b16 %v1209, %v1208
      %v1234 = vpack.c.b16 %v1211, %v1210
      %v1235 = vpack.c.b16 %v1213, %v1212
      %v1236 = vpack.c.b16 %v1215, %v1214
      %v1237 = vpack.c.b16 %v1217, %v1216
      %v1238 = vpack.c.b16 %v1219, %v1218
      %v1239 = vpack.c.b16 %v1221, %v1220
      %v1240 = vpack.c.b16 %v1223, %v1222
      %v1241 = vpack.c.b16 %v1225, %v1224
      %1258 = vmatprep.subr.bf16.mxu0 0
      %1259 = vmatpush1.bf16.msra.mxu0 %v1226
      %1260 = vmatprep.subr.bf16.mxu0 0
      %1261 = vmatpush1.bf16.msra.mxu0 %v1227
      %1262 = vmatprep.subr.bf16.mxu0 0
      %1263 = vmatpush1.bf16.msra.mxu0 %v1228
      %1264 = vmatprep.subr.bf16.mxu0 0
      %1265 = vmatpush1.bf16.msra.mxu0 %v1229
      %1266 = vmatprep.subr.bf16.mxu0 0
      %1267 = vmatpush1.bf16.msra.mxu0 %v1230
      %1268 = vmatprep.subr.bf16.mxu0 0
      %1269 = vmatpush1.bf16.msra.mxu0 %v1231
      %1270 = vmatprep.subr.bf16.mxu0 0
      %1271 = vmatpush1.bf16.msra.mxu0 %v1232
      %1272 = vmatprep.subr.bf16.mxu0 0
      %1273 = vmatpush1.bf16.msra.mxu0 %v1233
      %1274 = vmatprep.subr.bf16.mxu0 0
      %1275 = vmatpush1.bf16.msra.mxu0 %v1234
      %1276 = vmatprep.subr.bf16.mxu0 0
      %1277 = vmatpush1.bf16.msra.mxu0 %v1235
      %1278 = vmatprep.subr.bf16.mxu0 0
      %1279 = vmatpush1.bf16.msra.mxu0 %v1236
      %1280 = vmatprep.subr.bf16.mxu0 0
      %1281 = vmatpush1.bf16.msra.mxu0 %v1237
      %1282 = vmatprep.subr.bf16.mxu0 0
      %1283 = vmatpush1.bf16.msra.mxu0 %v1238
      %1284 = vmatprep.subr.bf16.mxu0 0
      %1285 = vmatpush1.bf16.msra.mxu0 %v1239
      %1286 = vmatprep.subr.bf16.mxu0 0
      %1287 = vmatpush1.bf16.msra.mxu0 %v1240
      %1288 = vmatprep.subr.bf16.mxu0 0
      %1289 = vmatpush1.bf16.msra.mxu0 %v1241
      %1290 = vmatprep.mubr.bf16.mxu0 %v1122
      %1291 = vmatmul.mubr.bf16.gmra.mrb[0].mxu0 %v1121
      %v1292 = vpop.f32.mrb[0].mxu0
      %v1293 = vadd.f32 %v1160, %v1292
      %v1294 = vpop.f32.mrb[0].mxu0
      %v1295 = vpop.f32.mrb[0].mxu0
      %v1296 = vadd.f32 %v1160, %v1295
      %v1297 = vpop.f32.mrb[0].mxu0
      %1298 = vdwg.mxu0
      %1299 = vst [vmem:[#allocation12] sm:$0xff] %v1293
      %1300 = vst [vmem:[#allocation12 + $0x8] sm:$0xff] %v1296
    $region65: #{tpu_custom_call.1} parent=1 // pred_fallthru
      _
    // Predicated region
    $region66: #{tpu_custom_call.1} parent=1 // pred_check
      _
    $region67: #{tpu_custom_call.1} parent=1 // pred_check_branch
      %1302 = sbr.rel (0) target = $region69
    $region68: #{tpu_custom_call.1} parent=1 // pred_region
      %s1304 = ssub.s32 256, 256
      %1305 = vsyncadd [#allocation5], %s1304
      %s1306 = sshll.u32 [#allocation12], 4
      %s1307 = int_to_ptr.vmem [resolvable:$true] %s1306
      %1312 = dma.vmem_to_hbm [thread:$0]  %s1307, 256, %s9, [#allocation5], 128, 128, 8
    $region69: #{tpu_custom_call.1} parent=1 // pred_fallthru
      _
    // Predicated region
    $region70: #{tpu_custom_call.1} parent=1 // pred_check
      _
    $region71: #{tpu_custom_call.1} parent=1 // pred_check_branch
      %1314 = sbr.rel (0) target = $region73
    $region72: #{tpu_custom_call.1} parent=1 // pred_region
      %1315 = dma.done [#allocation5], 256
    $region73: #{tpu_custom_call.1} parent=1 // pred_fallthru
      _
    %1316 = vsyncpa [#allocation4], 1
    %1317 = vsyncpa [#allocation7], 1
    %1318 = vsyncpa [#allocation10], 1
    %1319 = vsyncpa [#allocation5], 1

</llo_original>
